<compile_context>
chip_gen: v5e
topology: v5e:2x2
jax: 0.10.0
libtpu: 0.0.40
codegen_flags: <defaults>
</compile_context>

<pallas_src>
import jax
import jax.numpy as jnp
from jax.experimental import pallas as pl
from jax.experimental.pallas import tpu as pltpu

LANE = 128


def _residual_pointwise_kernel(x_ref, w_ref, b_ref, o_ref):
    # x_ref: (NB, C, TL) tile -- batch block x channels x spatial lanes
    # w_ref: (C, C) full weight (resident)
    # b_ref: (C, 1) f32 bias (resident, pre-cast in wrapper)
    x = x_ref[...]
    nb = x.shape[0]
    # fn(x): 1x1 conv == per-lane channel matmul. Broadcast the tiny weight
    # over the batch block and do a batched dot -> output is directly
    # (NB, C, TL), no post-dot transpose/relayout. f32 accumulation on MXU.
    wb = jnp.broadcast_to(w_ref[...], (nb,) + w_ref.shape)
    y = jnp.einsum("boc,bcl->bol", wb, x, preferred_element_type=jnp.float32)
    y = y + b_ref[...]  # (C,1) broadcasts over batch block and lanes
    # fused residual add in f32, single downcast at the store
    o_ref[...] = (y + x.astype(jnp.float32)).astype(o_ref.dtype)


def _vmem_capacity_bytes():
    try:
        return int(pltpu.get_tpu_info().vmem_capacity_bytes)
    except Exception:
        return 64 * 1024 * 1024  # conservative fallback: v7x per-TC VMEM


def _largest_lane_tile(hw128, max_lanes):
    """Largest multiple of 128 that divides hw128 and is <= max_lanes."""
    m = hw128 // LANE
    d_cap = max(1, min(m, max_lanes // LANE))
    best = 1
    for d in range(1, d_cap + 1):
        if m % d == 0:
            best = d
    return best * LANE


def _largest_batch_block(n, max_nb):
    best = 1
    for d in range(1, min(n, max(1, max_nb)) + 1):
        if n % d == 0:
            best = d
    return best


def _choose_tiling(n, c, hw128, itemsize, *, target_block_bytes, min_steps):
    vmem_cap = _vmem_capacity_bytes()
    # ~70% of physical VMEM, capped at 96 MiB: ~90 MiB on v5e/v6e (128 MiB),
    # ~45 MiB on v7x (64 MiB per TC).
    vmem_limit = min(int(vmem_cap * 0.7), 96 * 1024 * 1024)

    # Per-element VMEM footprint of one grid step:
    #   2x double-buffered input + 2x double-buffered output (itemsize each)
    #   + ~2 f32 epilogue temporaries (y and y + x).
    per_elem = 4 * itemsize + 2 * 4
    max_block_elems = max(c * LANE, vmem_limit // per_elem)

    # Keep at least `min_steps` grid steps when the tensor is large enough so
    # a v7x megacore can shard the parallel axes across 2 TCs and pipeline.
    total_elems = n * c * hw128
    cap_by_steps = max(c * LANE, total_elems // max(1, min_steps))

    block_elems = max(
        c * LANE,
        min(max_block_elems,
            max(c * LANE, target_block_bytes // itemsize),
            cap_by_steps),
    )

    tl = _largest_lane_tile(hw128, max(LANE, block_elems // c))
    nb = _largest_batch_block(n, block_elems // (c * tl))
    return nb, tl, vmem_limit


def residual_pointwise_conv(x_nchw, w, b, *,
                            target_block_bytes=4 * 1024 * 1024,
                            min_steps=16):
    """Computes Conv2d_1x1(x) + x for NCHW input x, fused in one Pallas kernel."""
    N, C, H, W = x_nchw.shape
    assert w.shape == (C, C) and b.shape == (C,)
    HW = H * W
    itemsize = jnp.dtype(x_nchw.dtype).itemsize

    # (N, C, H, W) -> (N, C, H*W): free reshape, no NCHW<->NHWC transpose.
    # Spatial axis lands on the lane axis, so stores are dense 128-lane vst's
    # even when C is tiny.
    x3d = x_nchw.reshape(N, C, HW)

    # Pad only up to the next multiple of 128 lanes (<=127 extra lanes,
    # no pad / no output slice at all when HW % 128 == 0).
    hw128 = pl.cdiv(HW, LANE) * LANE
    if hw128 != HW:
        x3d = jnp.pad(x3d, ((0, 0), (0, 0), (0, hw128 - HW)))

    nb, tl, vmem_limit = _choose_tiling(
        N, C, hw128, itemsize,
        target_block_bytes=target_block_bytes, min_steps=min_steps)

    # Bias pre-cast to f32 column: no per-step cast/broadcast on the VPU.
    b2d = b.reshape(C, 1).astype(jnp.float32)

    cost = pl.CostEstimate(
        flops=2 * N * hw128 * C * C,
        transcendentals=0,
        bytes_accessed=(N * C * hw128 * itemsize                 # read x
                        + N * C * hw128 * itemsize               # write out
                        + C * C * jnp.dtype(w.dtype).itemsize    # weight
                        + C * 4),                                # f32 bias
    )

    out3d = pl.pallas_call(
        _residual_pointwise_kernel,
        out_shape=jax.ShapeDtypeStruct((N, C, hw128), x3d.dtype),
        grid_spec=pltpu.PrefetchScalarGridSpec(
            num_scalar_prefetch=0,
            grid=(N // nb, hw128 // tl),
            in_specs=[
                # batch-blocked x tile: (NB, C, TL)
                pl.BlockSpec((nb, C, tl), lambda n, l: (n, 0, l)),
                # full weight, resident across the grid
                pl.BlockSpec((C, C), lambda n, l: (0, 0)),
                # f32 bias column, resident
                pl.BlockSpec((C, 1), lambda n, l: (0, 0)),
            ],
            out_specs=pl.BlockSpec((nb, C, tl), lambda n, l: (n, 0, l)),
        ),
        compiler_params=pltpu.CompilerParams(
            dimension_semantics=("parallel", "parallel"),
            vmem_limit_bytes=vmem_limit,
        ),
        cost_estimate=cost,
    )(x3d, w, b2d)

    if hw128 != HW:
        out3d = out3d[:, :, :HW]
    return out3d.reshape(N, C, H, W)


def _reference(x_nchw, w, b):
    N, C, H, W = x_nchw.shape
    x3 = x_nchw.reshape(N, C, H * W)
    r3 = jnp.einsum("oc,nci->noi", w, x3) + b[None, :, None] + x3
    return r3.reshape(N, C, H, W)


if __name__ == "__main__":
    key = jax.random.PRNGKey(0)
    kx, kw, kb, kx2, kx3 = jax.random.split(key, 5)

    # small NCHW input
    N, C, H, W = 2, 8, 16, 16
    x = jax.random.normal(kx, (N, C, H, W), dtype=jnp.float32)

    # deterministic "fn" parameters (1x1 conv = (C,C) weight + (C,) bias)
    w = jax.random.normal(kw, (C, C), dtype=jnp.float32) * 0.1
    b = jax.random.normal(kb, (C,), dtype=jnp.float32) * 0.1

    out = jax.block_until_ready(residual_pointwise_conv(x, w, b))
    ref = _reference(x, w, b)
    assert out.shape == (N, C, H, W)
    assert jnp.allclose(out, ref, atol=1e-5, rtol=1e-5)

    # ragged spatial size: H*W not a multiple of 128 -> pad-to-128 path
    x2 = jax.random.normal(kx2, (N, C, 10, 10), dtype=jnp.float32)
    out2 = jax.block_until_ready(residual_pointwise_conv(x2, w, b))
    ref2 = _reference(x2, w, b)
    assert jnp.allclose(out2, ref2, atol=1e-5, rtol=1e-5)

    # shape exercising batch-blocked (NB > 1) tiles with a larger lane tile
    x3 = jax.random.normal(kx3, (4, C, 32, 32), dtype=jnp.float32)
    out3 = jax.block_until_ready(residual_pointwise_conv(x3, w, b, min_steps=1))
    ref3 = _reference(x3, w, b)
    assert jnp.allclose(out3, ref3, atol=1e-5, rtol=1e-5)

    print("KERNEL_OK")
</pallas_src>

<mosaic_0001>
module attributes {stable_mosaic.version = 11 : i64} {
  func.func @_residual_pointwise_kernel(%arg0: i32, %arg1: i32, %arg2: memref<1x8x128xf32, #tpu.memory_space<vmem>>, %arg3: memref<8x8xf32, #tpu.memory_space<vmem>>, %arg4: memref<8x1xf32, #tpu.memory_space<vmem>>, %arg5: memref<1x8x128xf32, #tpu.memory_space<vmem>>) attributes {dimension_semantics = [#tpu.dimension_semantics<parallel>, #tpu.dimension_semantics<parallel>], iteration_bounds = array<i64: 2, 2>, scalar_prefetch = 0 : i64, scratch_operands = 0 : i64, tpu.core_type = #tpu.core_type<tc>, window_params = [{transform_indices = @transform_0, window_bounds = array<i64: 1, 8, 128>}, {pipeline_mode = #tpu.pipeline_mode<synchronous>, transform_indices = @transform_1, window_bounds = array<i64: 8, 8>}, {pipeline_mode = #tpu.pipeline_mode<synchronous>, transform_indices = @transform_2, window_bounds = array<i64: 8, 1>}, {transform_indices = @transform_3, window_bounds = array<i64: 1, 8, 128>}]} {
    %c0 = arith.constant 0 : index
    %c0_0 = arith.constant 0 : index
    %c0_1 = arith.constant 0 : index
    %0 = vector.load %arg2[%c0, %c0_0, %c0_1] : memref<1x8x128xf32, #tpu.memory_space<vmem>>, vector<1x8x128xf32>
    %c0_2 = arith.constant 0 : index
    %c0_3 = arith.constant 0 : index
    %1 = vector.load %arg3[%c0_2, %c0_3] : memref<8x8xf32, #tpu.memory_space<vmem>>, vector<8x8xf32>
    %2 = vector.shape_cast %1 : vector<8x8xf32> to vector<1x8x8xf32>
    "tpu.trace_start"() <{level = 10 : i32, message = "boc,bcl->bol"}> : () -> ()
    %cst = arith.constant dense<0.000000e+00> : vector<1x8x128xf32>
    %3 = tpu.matmul %2, %0, %cst {dimension_numbers = #tpu.dot_dimension_numbers<[2], [1], [1], [2], [0, 0, 0, 1, 1, 2], [0], [0]>} : vector<1x8x8xf32>, vector<1x8x128xf32>, vector<1x8x128xf32> -> vector<1x8x128xf32>
    "tpu.trace_stop"() : () -> ()
    %c0_4 = arith.constant 0 : index
    %c0_5 = arith.constant 0 : index
    %4 = vector.load %arg4[%c0_4, %c0_5] : memref<8x1xf32, #tpu.memory_space<vmem>>, vector<8x1xf32>
    %5 = vector.shape_cast %4 : vector<8x1xf32> to vector<1x8x1xf32>
    %6 = vector.broadcast %5 : vector<1x8x1xf32> to vector<1x8x128xf32>
    %7 = arith.addf %3, %6 : vector<1x8x128xf32>
    %8 = arith.addf %7, %0 : vector<1x8x128xf32>
    %c0_6 = arith.constant 0 : index
    %c0_7 = arith.constant 0 : index
    %c0_8 = arith.constant 0 : index
    %9 = vector.load %arg5[%c0_6, %c0_7, %c0_8] : memref<1x8x128xf32, #tpu.memory_space<vmem>>, vector<1x8x128xf32>
    tpu.vector_store %arg5[%c0_6, %c0_7, %c0_8], %8 {strides = array<i32>} : memref<1x8x128xf32, #tpu.memory_space<vmem>>, vector<1x8x128xf32>,
    return
  }
  func.func @transform_0(%arg0: i32, %arg1: i32) -> (i32, i32, i32) {
    %c0_i32 = arith.constant 0 : i32
    %c0_i32_0 = arith.constant 0 : i32
    return %arg0, %c0_i32, %arg1 : i32, i32, i32
  }
  func.func @transform_1(%arg0: i32, %arg1: i32) -> (i32, i32) {
    %c0_i32 = arith.constant 0 : i32
    %c0_i32_0 = arith.constant 0 : i32
    %c0_i32_1 = arith.constant 0 : i32
    return %c0_i32, %c0_i32_0 : i32, i32
  }
  func.func @transform_2(%arg0: i32, %arg1: i32) -> (i32, i32) {
    %c0_i32 = arith.constant 0 : i32
    %c0_i32_0 = arith.constant 0 : i32
    %c0_i32_1 = arith.constant 0 : i32
    return %c0_i32, %c0_i32_0 : i32, i32
  }
  func.func @transform_3(%arg0: i32, %arg1: i32) -> (i32, i32, i32) {
    %c0_i32 = arith.constant 0 : i32
    %c0_i32_0 = arith.constant 0 : i32
    return %arg0, %c0_i32, %arg1 : i32, i32, i32
  }
}

</mosaic_0001>

<llo_original>
// kernel: tpu_custom_call.1
$region0: #{tpu_custom_call.1}
  #allocation0 [shape = 'u32[]', space=smem, size = 0x4, offset = 0x4, fixed_abs, tag = 'smem constant byte address 0x4 - core index']
  #allocation1 [shape = 'u32[72,128]{1,0:T(1,128)}', space=vmem, size = 0x9000, scoped, tag = 'internal scratch']
  %s0 = inlined_call_operand.hbm [shape: f32[2,8,256], index: 0, kind: input, shape index: {}]
  %s1 = inlined_call_operand.vmem [shape: f32[8,8], index: 1, kind: input, shape index: {}]
  %s2 = inlined_call_operand.vmem [shape: f32[8,1], index: 2, kind: input, shape index: {}]
  %s3 = inlined_call_operand.hbm [shape: f32[2,8,256], index: 3, kind: output, shape index: {}]
  %s4 = sld [smem:[#allocation0]]
  $region49: #{tpu_custom_call.1} parent=0
    _
  %s6 = ssub.s32 1, %s4
  %s7 = scalar_select 0, %s6, %s4
  $region1: #{tpu_custom_call.1} parent=0
    #allocation2 [shape = 'u8[8192]{0}', space=vmem, size = 0x2000, scoped, tag = 'input window, operand 0']
    #allocation3 [shape = 's32[2]{0}', space=sflag, size = 0x8, scoped, tag = 'scoped memory for tpu_custom_call.1']
    #allocation4 [shape = 's32[2]{0}', space=sflag, size = 0x8, scoped, tag = 'scoped memory for tpu_custom_call.1']
    #allocation5 [shape = 'u8[8192]{0}', space=vmem, size = 0x2000, scoped, tag = 'output window, operand 0']
    %8 = vsyncpa [#allocation3], 0
    %s9 = scalar_lea.sflag [#allocation3], 1
    %10 = vsyncpa %s9, 0
    %11 = vsyncpa [#allocation4], 0
    %s12 = scalar_lea.sflag [#allocation4], 1
    %13 = vsyncpa %s12, 0
    loop: start=0, step=1, limit=6
    $region2: #{tpu_custom_call.1} parent=1 // loop_pre_header
      _
    $region3: #{tpu_custom_call.1} parent=1 // loop_header
      %s15 = sphi 0, %s19
      %p16 = scmp.ge.s32.totalorder %s15, 6
      %s22 = sphi 0, %s34
      %s23 = sphi 0, %s30
      %s24 = sphi 0, %s22
      %s25 = sphi 0, %s23
      %s26 = sphi 0, %s24
      %s27 = sphi 0, %s25
      %s39 = sphi 0, %s41
      %s42 = sphi 0, %s39
      %s43 = sphi 0, %s42
      %s59 = sphi 0, %s43
      %s63 = sphi 0, %s63
      %s65 = sphi 0, %s63
      %s66 = sphi 0, %s65
      %s80 = sphi 0, %s66
      %s84 = sphi 0, %s84
      %s86 = sphi 0, %s84
      %s87 = sphi 0, %s86
      %s101 = sphi 0, %s87
      %s109 = sphi 0, %s111
      %s112 = sphi 0, %s109
      %s113 = sphi 0, %s112
      %s129 = sphi 0, %s113
    $region4: #{tpu_custom_call.1} parent=1 // loop_header_branch
      %18 = sbr.rel (%p16) target = $region8
    $region5: #{tpu_custom_call.1} parent=1 // loop_body
      %s20 = ssub.s32 %s15, 1
      %s21 = ssub.s32 %s15, 2
      %s28 = sadd.s32 1, %s23
      %p29 = scmp.ge.s32.totalorder %s28, 2
      %s30 = scalar_select %p29, 0, %s28
      %s31 = sadd.s32 1, %s22
      %s32 = scalar_select %p29, %s31, %s22
      %p33 = scmp.ge.s32.totalorder %s32, 2
      %s34 = scalar_select %p33, 0, %s32
      %s35 = ssub.s32 %s22, %s34
      %s36 = ssub.s32 %s23, %s30
      %s37 = sor.u32 %s35, %s36
      %p38 = scmp.eq.s32.totalorder %s37, 0
      %s40 = sadd.s32 %s39, 1
      %s41 = scalar_select %p38, %s39, %s40
      %p44 = pneg %p38
      %p45 = scmp.eq.s32.totalorder %s15, 3
      %p46 = por %p44, %p45
      %p47 = scmp.ne.s32.totalorder %s39, %s42
      %p48 = scmp.eq.s32.totalorder %s15, 0
      %p49 = por %p47, %p48
      %p50 = scmp.ne.s32.totalorder %s39, %s42
      %p51 = scmp.eq.s32.totalorder %s20, 3
      %p52 = por %p50, %p51
      %p53 = scmp.ne.s32.totalorder %s42, %s43
      %p54 = scmp.eq.s32.totalorder %s20, 0
      %p55 = por %p53, %p54
      %p56 = scmp.ne.s32.totalorder %s42, %s43
      %p57 = scmp.eq.s32.totalorder %s21, 3
      %p58 = por %p56, %p57
      %p60 = scmp.ne.s32.totalorder %s43, %s59
      %p61 = scmp.eq.s32.totalorder %s21, 0
      %p62 = por %p60, %p61
      %s64 = sadd.s32 %s63, 1
      %p67 = scmp.eq.s32.totalorder %s15, 3
      %p68 = scmp.ne.s32.totalorder %s63, %s65
      %p69 = scmp.eq.s32.totalorder %s15, 0
      %p70 = por %p68, %p69
      %p71 = scmp.ne.s32.totalorder %s63, %s65
      %p72 = scmp.eq.s32.totalorder %s20, 3
      %p73 = por %p71, %p72
      %p74 = scmp.ne.s32.totalorder %s65, %s66
      %p75 = scmp.eq.s32.totalorder %s20, 0
      %p76 = por %p74, %p75
      %p77 = scmp.ne.s32.totalorder %s65, %s66
      %p78 = scmp.eq.s32.totalorder %s21, 3
      %p79 = por %p77, %p78
      %p81 = scmp.ne.s32.totalorder %s66, %s80
      %p82 = scmp.eq.s32.totalorder %s21, 0
      %p83 = por %p81, %p82
      %s85 = sadd.s32 %s84, 1
      %p88 = scmp.eq.s32.totalorder %s15, 3
      %p89 = scmp.ne.s32.totalorder %s84, %s86
      %p90 = scmp.eq.s32.totalorder %s15, 0
      %p91 = por %p89, %p90
      %p92 = scmp.ne.s32.totalorder %s84, %s86
      %p93 = scmp.eq.s32.totalorder %s20, 3
      %p94 = por %p92, %p93
      %p95 = scmp.ne.s32.totalorder %s86, %s87
      %p96 = scmp.eq.s32.totalorder %s20, 0
      %p97 = por %p95, %p96
      %p98 = scmp.ne.s32.totalorder %s86, %s87
      %p99 = scmp.eq.s32.totalorder %s21, 3
      %p100 = por %p98, %p99
      %p102 = scmp.ne.s32.totalorder %s87, %s101
      %p103 = scmp.eq.s32.totalorder %s21, 0
      %p104 = por %p102, %p103
      %s105 = ssub.s32 %s22, %s34
      %s106 = ssub.s32 %s23, %s30
      %s107 = sor.u32 %s105, %s106
      %p108 = scmp.eq.s32.totalorder %s107, 0
      %s110 = sadd.s32 %s109, 1
      %s111 = scalar_select %p108, %s109, %s110
      %p114 = pneg %p108
      %p115 = scmp.eq.s32.totalorder %s15, 3
      %p116 = por %p114, %p115
      %p117 = scmp.ne.s32.totalorder %s109, %s112
      %p118 = scmp.eq.s32.totalorder %s15, 0
      %p119 = por %p117, %p118
      %p120 = scmp.ne.s32.totalorder %s109, %s112
      %p121 = scmp.eq.s32.totalorder %s20, 3
      %p122 = por %p120, %p121
      %p123 = scmp.ne.s32.totalorder %s112, %s113
      %p124 = scmp.eq.s32.totalorder %s20, 0
      %p125 = por %p123, %p124
      %p126 = scmp.ne.s32.totalorder %s112, %s113
      %p127 = scmp.eq.s32.totalorder %s21, 3
      %p128 = por %p126, %p127
      %p130 = scmp.ne.s32.totalorder %s113, %s129
      %p131 = scmp.eq.s32.totalorder %s21, 0
      %p132 = por %p130, %p131
      %p133 = scmp.le.s32.totalorder 1, %s15
      %p134 = scmp.lt.s32.totalorder %s15, 5
      %p135 = pnand %p133, %p134
      %p136 = pneg %p135
      // Predicated region
      $region9: #{tpu_custom_call.1} parent=5 // pred_check
        _
      $region10: #{tpu_custom_call.1} parent=5 // pred_check_branch
        %138 = sbr.rel (%p135) target = $region12
      $region11: #{tpu_custom_call.1} parent=5 // pred_region
        %s139 = ssub.s32 %s15, 1
        // Predicated region
        $region13: #{tpu_custom_call.1} parent=11 // pred_check
          %p140 = pneg %p76
        $region14: #{tpu_custom_call.1} parent=11 // pred_check_branch
          %142 = sbr.rel (%p140) target = $region16
        $region15: #{tpu_custom_call.1} parent=11 // pred_region
          _
        $region16: #{tpu_custom_call.1} parent=11 // pred_fallthru
          _
        // Predicated region
        $region17: #{tpu_custom_call.1} parent=11 // pred_check
          %p143 = pneg %p97
        $region18: #{tpu_custom_call.1} parent=11 // pred_check_branch
          %145 = sbr.rel (%p143) target = $region20
        $region19: #{tpu_custom_call.1} parent=11 // pred_region
          _
        $region20: #{tpu_custom_call.1} parent=11 // pred_fallthru
          _
      $region12: #{tpu_custom_call.1} parent=5 // pred_fallthru
        _
      %p146 = scmp.lt.s32.totalorder %s15, 4
      // Predicated region
      $region21: #{tpu_custom_call.1} parent=5 // pred_check
        %p147 = pneg %p146
      $region22: #{tpu_custom_call.1} parent=5 // pred_check_branch
        %149 = sbr.rel (%p147) target = $region24
      $region23: #{tpu_custom_call.1} parent=5 // pred_region
        // Predicated region
        $region25: #{tpu_custom_call.1} parent=23 // pred_check
          %p150 = pneg %p49
        $region26: #{tpu_custom_call.1} parent=23 // pred_check_branch
          %152 = sbr.rel (%p150) target = $region28
        $region27: #{tpu_custom_call.1} parent=23 // pred_region
          %s153 = sand.u32 %s39, 1
          %s154 = scalar_lea.sflag [#allocation3], %s153
          %s155 = sand.u32 %s39, 1
          %s156 = smul.addr %s155, 8
          %s157 = scalar_lea.vmem [#allocation2], %s156
          %159 = vsyncadd %s154, 0
          %s160 = smul.addr %s22, 2
          %s161 = sadd.s32 %s23, %s160
          %s162 = smul.addr %s161, 8
          %s163 = scalar_lea.hbm %s0, %s162
          %s165 = sshll.u32 %s163, 4
          %s166 = int_to_ptr.hbm [resolvable:$true] %s165
          %s167 = sshll.u32 %s157, 4
          %s168 = int_to_ptr.vmem [resolvable:$true] %s167
          %170 = dma.hbm_to_vmem [thread:$0]  %s166, 128, %s168, %s154
        $region28: #{tpu_custom_call.1} parent=23 // pred_fallthru
          _
      $region24: #{tpu_custom_call.1} parent=5 // pred_fallthru
        _
      %p171 = scmp.le.s32.totalorder 1, %s15
      %p172 = scmp.lt.s32.totalorder %s15, 5
      %p173 = pnand %p171, %p172
      %p174 = pneg %p173
      // Predicated region
      $region29: #{tpu_custom_call.1} parent=5 // pred_check
        _
      $region30: #{tpu_custom_call.1} parent=5 // pred_check_branch
        %176 = sbr.rel (%p173) target = $region32
      $region31: #{tpu_custom_call.1} parent=5 // pred_region
        %s177 = ssub.s32 %s15, 1
        %s178 = sand.u32 %s42, 1
        %s179 = scalar_lea.sflag [#allocation3], %s178
        %s180 = sand.u32 %s42, 1
        %s181 = smul.addr %s180, 8
        %s182 = scalar_lea.vmem [#allocation2], %s181
        // Predicated region
        $region33: #{tpu_custom_call.1} parent=31 // pred_check
          %p183 = pneg %p55
        $region34: #{tpu_custom_call.1} parent=31 // pred_check_branch
          %185 = sbr.rel (%p183) target = $region36
        $region35: #{tpu_custom_call.1} parent=31 // pred_region
          %187 = dma.done %s179, 128
        $region36: #{tpu_custom_call.1} parent=31 // pred_fallthru
          _
        %s188 = sand.u32 %s42, 1
        %s189 = scalar_lea.sflag [#allocation3], %s188
        %s190 = sand.u32 %s42, 1
        %s191 = smul.addr %s190, 8
        %s192 = scalar_lea.vmem [#allocation2], %s191
        %p193 = pneg %p55
        %p194 = pneg %p52
        %p195 = pneg %p76
        %p196 = pneg %p73
        %p197 = pneg %p97
        %p198 = pneg %p94
        %p199 = pneg %p125
        %p200 = pneg %p122
        %s201 = sand.u32 %s112, 1
        %s202 = scalar_lea.sflag [#allocation4], %s201
        %s203 = sand.u32 %s112, 1
        %s204 = smul.addr %s203, 8
        %s205 = scalar_lea.vmem [#allocation5], %s204
        %v206 = vld [vmem:[%s182] sm:$0xff]
        %v207 = vld [vmem:[%s1] sm:$0xff]
        %v208 = vld [vmem:[%s2] sm:$0xff]
        %210 = vset.pattern.permute.xlu0 0
        %211 = vperm.xlu0 %210, %v208
        %v212 = vpop.permute.xlu0 %211
        %vm214 = vcmask 64512
        %v216 = vsel %vm214, %v207, 0
        %218 = vmatpush.msra.mxu0 0.0
        %219 = vmatpush.msra.mxu0 0.0
        %220 = vmatpush.msra.mxu0 0.0
        %221 = vmatpush.msra.mxu0 0.0
        %222 = vmatpush.msra.mxu0 0.0
        %223 = vmatpush.msra.mxu0 0.0
        %224 = vmatpush.msra.mxu0 0.0
        %225 = vmatpush.msra.mxu0 0.0
        %226 = vmatpush.msra.mxu0 0.0
        %227 = vmatpush.msra.mxu0 0.0
        %228 = vmatpush.msra.mxu0 0.0
        %229 = vmatpush.msra.mxu0 0.0
        %230 = vmatpush.msra.mxu0 0.0
        %231 = vmatpush.msra.mxu0 0.0
        %232 = vmatpush.msra.mxu0 0.0
        %233 = vmatpush.msra.mxu0 %v206
        %234 = vmatmul.f32.gmra.mxu0 %v216
        %v235 = vpop.f32.mrf.mxu0
        %v236 = vadd.f32 %v212, %v235
        %237 = vdwg.mxu0
        %v238 = vadd.f32 %v236, %v206
        %239 = vst [vmem:[%s205] sm:$0xff] %v238
        %s240 = sand.u32 %s112, 1
        %s241 = scalar_lea.sflag [#allocation4], %s240
        %s242 = sand.u32 %s112, 1
        %s243 = smul.addr %s242, 8
        %s244 = scalar_lea.vmem [#allocation5], %s243
        // Predicated region
        $region37: #{tpu_custom_call.1} parent=31 // pred_check
          %p245 = pneg %p122
        $region38: #{tpu_custom_call.1} parent=31 // pred_check_branch
          %247 = sbr.rel (%p245) target = $region40
        $region39: #{tpu_custom_call.1} parent=31 // pred_region
          %249 = vsyncadd %s241, 0
          %s250 = smul.addr %s24, 2
          %s251 = sadd.s32 %s25, %s250
          %s252 = smul.addr %s251, 8
          %s253 = scalar_lea.hbm %s3, %s252
          %s255 = sshll.u32 %s244, 4
          %s256 = int_to_ptr.vmem [resolvable:$true] %s255
          %s257 = sshll.u32 %s253, 4
          %s258 = int_to_ptr.hbm [resolvable:$true] %s257
          %260 = dma.vmem_to_hbm [thread:$0]  %s256, 128, %s258, %s241
        $region40: #{tpu_custom_call.1} parent=31 // pred_fallthru
          _
      $region32: #{tpu_custom_call.1} parent=5 // pred_fallthru
        _
      %p261 = scmp.le.s32.totalorder 2, %s15
      // Predicated region
      $region41: #{tpu_custom_call.1} parent=5 // pred_check
        %p262 = pneg %p261
      $region42: #{tpu_custom_call.1} parent=5 // pred_check_branch
        %264 = sbr.rel (%p262) target = $region44
      $region43: #{tpu_custom_call.1} parent=5 // pred_region
        %s265 = ssub.s32 %s15, 2
        // Predicated region
        $region45: #{tpu_custom_call.1} parent=43 // pred_check
          %p266 = pneg %p128
        $region46: #{tpu_custom_call.1} parent=43 // pred_check_branch
          %268 = sbr.rel (%p266) target = $region48
        $region47: #{tpu_custom_call.1} parent=43 // pred_region
          %s269 = sand.u32 %s113, 1
          %s270 = scalar_lea.sflag [#allocation4], %s269
          %s271 = sand.u32 %s113, 1
          %s272 = smul.addr %s271, 8
          %s273 = scalar_lea.vmem [#allocation5], %s272
          %275 = dma.done %s270, 128
        $region48: #{tpu_custom_call.1} parent=43 // pred_fallthru
          _
      $region44: #{tpu_custom_call.1} parent=5 // pred_fallthru
        _
    $region6: #{tpu_custom_call.1} parent=1 // loop_footer
      %s19 = sadd.s32 1, %s15
    $region7: #{tpu_custom_call.1} parent=1 // loop_footer_branch
      %14 = sbr.rel target = $region3
    $region8: #{tpu_custom_call.1} parent=1 // loop_exit
      _
    %276 = vsyncpa [#allocation3], 1
    %s277 = scalar_lea.sflag [#allocation3], 1
    %278 = vsyncpa %s277, 1
    %279 = vsyncpa [#allocation4], 1
    %s280 = scalar_lea.sflag [#allocation4], 1
    %281 = vsyncpa %s280, 1

</llo_original>
